<compile_context>
chip_gen: v5e
topology: v5e:2x2
jax: 0.10.0
libtpu: 0.0.40
codegen_flags: <defaults>
</compile_context>

<pallas_src>
import jax
import jax.numpy as jnp
from jax.experimental import pallas as pl
from jax.experimental.pallas import tpu as pltpu


_LANE = 128
_MAX_TILE_M = 32768  # pixels per grid step; (8, 32768) f32 block ~ 1 MiB


def _round_up(x, m):
    return ((x + m - 1) // m) * m


def _fused_kernel(x_ref, wt_ref, b_ref, o_ref):
    # x_ref:  (C_in, TM)    pixels on lanes (batch dim squeezed away)
    # wt_ref: (C_out, C_in) fused weight (W1 @ W2)^T
    # b_ref:  (C_out, 1)    fused bias (b1 @ W2 + b2)
    # o_ref:  (C_out, TM)
    y = jnp.dot(wt_ref[...], x_ref[...],
                preferred_element_type=jnp.float32) + b_ref[...]
    o_ref[...] = jnp.tanh(y).astype(o_ref.dtype)


def model_forward(x_nchw, w1, b1, w2, b2):
    """x_nchw: (N, C_in, H, W) f32.  Returns (N, C_out, H, W) f32."""
    N, C_in, H, W = x_nchw.shape
    C_out = w2.shape[1]
    M = H * W

    # Fuse the two 1x1 transposed convs (ConvTranspose2d weight is
    # (C_in, C_out, 1, 1), kept here in squeezed (C_in, C_out) form).
    w_eff = w1 @ w2                  # (C_in, C_out)
    b_eff = b1 @ w2 + b2             # (C_out,)
    wt = w_eff.T                     # (C_out, C_in)
    b_col = b_eff.reshape(C_out, 1)  # (C_out, 1)

    # Layout-preserving reshape (free): NCHW -> (N, C_in, H*W).
    x_flat = x_nchw.reshape(N, C_in, M)

    tile_m = min(_round_up(M, _LANE), _MAX_TILE_M)
    num_m_tiles = pl.cdiv(M, tile_m)
    # v7x has 2 TensorCores: make sure the 'parallel' grid has >= 2 steps so
    # both cores get work.  On v5e/v6e this adds one ~0.35us step at most.
    if N * num_m_tiles < 2 and M > _LANE:
        tile_m = _round_up(-(-M // 2), _LANE)
        num_m_tiles = pl.cdiv(M, tile_m)

    grid = (N, num_m_tiles)

    cost = pl.CostEstimate(
        flops=(2 * C_in + 1) * C_out * N * M,
        transcendentals=C_out * N * M,
        bytes_accessed=4 * (C_in * N * M + C_out * N * M + C_in * C_out + C_out),
    )

    out_flat = pl.pallas_call(
        _fused_kernel,
        out_shape=jax.ShapeDtypeStruct((N, C_out, M), jnp.float32),
        grid_spec=pltpu.PrefetchScalarGridSpec(
            num_scalar_prefetch=0,
            grid=grid,
            in_specs=[
                # batch dim squeezed; channels on sublanes, pixels on lanes
                pl.BlockSpec((None, C_in, tile_m), lambda n, i: (n, 0, i)),
                pl.BlockSpec((C_out, C_in), lambda n, i: (0, 0)),
                pl.BlockSpec((C_out, 1), lambda n, i: (0, 0)),
            ],
            out_specs=pl.BlockSpec((None, C_out, tile_m),
                                   lambda n, i: (n, 0, i)),
        ),
        compiler_params=pltpu.CompilerParams(
            dimension_semantics=("parallel", "parallel"),
        ),
        cost_estimate=cost,
    )(x_flat, wt, b_col)

    # Layout-preserving reshape back to NCHW (no transpose needed).
    return out_flat.reshape(N, C_out, H, W)


def reference_forward(x_nchw, w1, b1, w2, b2):
    """Pure-JAX reference of the unfused two-conv math (correctness check)."""
    x = jnp.transpose(x_nchw, (0, 2, 3, 1))                  # NHWC
    h = jnp.einsum("nhwc,cd->nhwd", x, w1) + b1
    y = jnp.einsum("nhwc,cd->nhwd", h, w2) + b2
    return jnp.transpose(jnp.tanh(y), (0, 3, 1, 2))          # NCHW


if __name__ == "__main__":
    key = jax.random.PRNGKey(0)
    k_x, k_w1, k_b1, k_w2, k_b2 = jax.random.split(key, 5)

    # Small shapes consistent with the module (channels fixed by the model:
    # 6 -> 50 -> 6); batch=2 exercises the squeezed batch grid axis.
    N, C_IN, C_MID, C_OUT, H, W = 2, 6, 50, 6, 32, 32

    x = jax.random.normal(k_x, (N, C_IN, H, W), dtype=jnp.float32)

    # Deterministic synthetic parameters (ConvTranspose2d weights kept in the
    # squeezed (C_in, C_out) form).
    w1 = jax.random.normal(k_w1, (C_IN, C_MID), dtype=jnp.float32) * 0.1
    b1 = jax.random.normal(k_b1, (C_MID,), dtype=jnp.float32) * 0.1
    w2 = jax.random.normal(k_w2, (C_MID, C_OUT), dtype=jnp.float32) * 0.1
    b2 = jax.random.normal(k_b2, (C_OUT,), dtype=jnp.float32) * 0.1

    out = model_forward(x, w1, b1, w2, b2)
    out = jax.block_until_ready(out)

    ref = reference_forward(x, w1, b1, w2, b2)
    assert out.shape == (N, C_OUT, H, W)
    assert jnp.allclose(out, ref, atol=1e-5, rtol=1e-5)

    print("KERNEL_OK")
</pallas_src>

<mosaic_0001>
module attributes {stable_mosaic.version = 11 : i64} {
  func.func @_fused_kernel(%arg0: i32, %arg1: i32, %arg2: memref<1x6x1024xf32, #tpu.memory_space<vmem>>, %arg3: memref<6x6xf32, #tpu.memory_space<vmem>>, %arg4: memref<6x1xf32, #tpu.memory_space<vmem>>, %arg5: memref<1x6x1024xf32, #tpu.memory_space<vmem>>) attributes {dimension_semantics = [#tpu.dimension_semantics<parallel>, #tpu.dimension_semantics<parallel>], iteration_bounds = array<i64: 2, 1>, scalar_prefetch = 0 : i64, scratch_operands = 0 : i64, tpu.core_type = #tpu.core_type<tc>, window_params = [{transform_indices = @transform_0, window_bounds = array<i64: 1, 6, 1024>}, {pipeline_mode = #tpu.pipeline_mode<synchronous>, transform_indices = @transform_1, window_bounds = array<i64: 6, 6>}, {pipeline_mode = #tpu.pipeline_mode<synchronous>, transform_indices = @transform_2, window_bounds = array<i64: 6, 1>}, {transform_indices = @transform_3, window_bounds = array<i64: 1, 6, 1024>}]} {
    %c0 = arith.constant 0 : index
    %c0_0 = arith.constant 0 : index
    %0 = vector.load %arg3[%c0, %c0_0] : memref<6x6xf32, #tpu.memory_space<vmem>>, vector<6x6xf32>
    %c0_1 = arith.constant 0 : index
    %c0_2 = arith.constant 0 : index
    %c0_3 = arith.constant 0 : index
    %1 = vector.load %arg2[%c0_1, %c0_2, %c0_3] : memref<1x6x1024xf32, #tpu.memory_space<vmem>>, vector<1x6x1024xf32>
    %2 = vector.shape_cast %1 : vector<1x6x1024xf32> to vector<6x1024xf32>
    %cst = arith.constant dense<0.000000e+00> : vector<6x1024xf32>
    %3 = tpu.matmul %0, %2, %cst {dimension_numbers = #tpu.dot_dimension_numbers<[1], [0], [0], [1], [0, 0, 1, 1], [], []>} : vector<6x6xf32>, vector<6x1024xf32>, vector<6x1024xf32> -> vector<6x1024xf32>
    %c0_4 = arith.constant 0 : index
    %c0_5 = arith.constant 0 : index
    %4 = vector.load %arg4[%c0_4, %c0_5] : memref<6x1xf32, #tpu.memory_space<vmem>>, vector<6x1xf32>
    %5 = vector.broadcast %4 : vector<6x1xf32> to vector<6x1024xf32>
    %6 = arith.addf %3, %5 : vector<6x1024xf32>
    %7 = math.tanh %6 : vector<6x1024xf32>
    %c0_6 = arith.constant 0 : index
    %c0_7 = arith.constant 0 : index
    %c0_8 = arith.constant 0 : index
    %8 = vector.load %arg5[%c0_6, %c0_7, %c0_8] : memref<1x6x1024xf32, #tpu.memory_space<vmem>>, vector<1x6x1024xf32>
    %9 = vector.shape_cast %8 : vector<1x6x1024xf32> to vector<6x1024xf32>
    %10 = vector.shape_cast %7 : vector<6x1024xf32> to vector<1x6x1024xf32>
    tpu.vector_store %arg5[%c0_6, %c0_7, %c0_8], %10 {strides = array<i32>} : memref<1x6x1024xf32, #tpu.memory_space<vmem>>, vector<1x6x1024xf32>,
    return
  }
  func.func @transform_0(%arg0: i32, %arg1: i32) -> (i32, i32, i32) {
    %c0_i32 = arith.constant 0 : i32
    %c0_i32_0 = arith.constant 0 : i32
    return %arg0, %c0_i32, %arg1 : i32, i32, i32
  }
  func.func @transform_1(%arg0: i32, %arg1: i32) -> (i32, i32) {
    %c0_i32 = arith.constant 0 : i32
    %c0_i32_0 = arith.constant 0 : i32
    %c0_i32_1 = arith.constant 0 : i32
    return %c0_i32, %c0_i32_0 : i32, i32
  }
  func.func @transform_2(%arg0: i32, %arg1: i32) -> (i32, i32) {
    %c0_i32 = arith.constant 0 : i32
    %c0_i32_0 = arith.constant 0 : i32
    %c0_i32_1 = arith.constant 0 : i32
    return %c0_i32, %c0_i32_0 : i32, i32
  }
  func.func @transform_3(%arg0: i32, %arg1: i32) -> (i32, i32, i32) {
    %c0_i32 = arith.constant 0 : i32
    %c0_i32_0 = arith.constant 0 : i32
    return %arg0, %c0_i32, %arg1 : i32, i32, i32
  }
}

</mosaic_0001>

<llo_original>
// kernel: tpu_custom_call.1
$region0: #{tpu_custom_call.1}
  #allocation0 [shape = 'u32[]', space=smem, size = 0x4, offset = 0x4, fixed_abs, tag = 'smem constant byte address 0x4 - core index']
  #allocation1 [shape = 'u32[72,128]{1,0:T(1,128)}', space=vmem, size = 0x9000, scoped, tag = 'internal scratch']
  %s0 = inlined_call_operand.vmem [shape: f32[2,6,1024], index: 0, kind: input, shape index: {}]
  %s1 = inlined_call_operand.vmem [shape: f32[6,6], index: 1, kind: input, shape index: {}]
  %s2 = inlined_call_operand.vmem [shape: f32[6,1], index: 2, kind: input, shape index: {}]
  %s3 = inlined_call_operand.vmem [shape: f32[2,6,1024], index: 3, kind: output, shape index: {}]
  %s4 = sld [smem:[#allocation0]]
  $region45: #{tpu_custom_call.1} parent=0
    _
  %s6 = ssub.s32 1, %s4
  %s7 = scalar_select 0, %s6, %s4
  loop: start=0, step=1, limit=4
  $region2: #{tpu_custom_call.1} parent=0 // loop_pre_header
    _
  $region3: #{tpu_custom_call.1} parent=0 // loop_header
    %s9 = sphi 0, %s13
    %p10 = scmp.ge.s32.totalorder %s9, 4
    %s16 = sphi 0, %s28
    %s17 = sphi 0, %s24
    %s18 = sphi 0, %s16
    %s19 = sphi 0, %s17
    %s20 = sphi 0, %s18
    %s21 = sphi 0, %s19
    %s33 = sphi 0, %s35
    %s36 = sphi 0, %s33
    %s37 = sphi 0, %s36
    %s53 = sphi 0, %s37
    %s57 = sphi 0, %s57
    %s59 = sphi 0, %s57
    %s60 = sphi 0, %s59
    %s74 = sphi 0, %s60
    %s78 = sphi 0, %s78
    %s80 = sphi 0, %s78
    %s81 = sphi 0, %s80
    %s95 = sphi 0, %s81
    %s103 = sphi 0, %s105
    %s106 = sphi 0, %s103
    %s107 = sphi 0, %s106
    %s123 = sphi 0, %s107
  $region4: #{tpu_custom_call.1} parent=0 // loop_header_branch
    %12 = sbr.rel (%p10) target = $region8
  $region5: #{tpu_custom_call.1} parent=0 // loop_body
    %s14 = ssub.s32 %s9, 1
    %s15 = ssub.s32 %s9, 2
    %s22 = sadd.s32 1, %s17
    %p23 = scmp.ge.s32.totalorder %s22, 1
    %s24 = scalar_select %p23, 0, %s22
    %s25 = sadd.s32 1, %s16
    %s26 = scalar_select %p23, %s25, %s16
    %p27 = scmp.ge.s32.totalorder %s26, 2
    %s28 = scalar_select %p27, 0, %s26
    %s29 = ssub.s32 %s16, %s28
    %s30 = ssub.s32 %s17, %s24
    %s31 = sor.u32 %s29, %s30
    %p32 = scmp.eq.s32.totalorder %s31, 0
    %s34 = sadd.s32 %s33, 1
    %s35 = scalar_select %p32, %s33, %s34
    %p38 = pneg %p32
    %p39 = scmp.eq.s32.totalorder %s9, 1
    %p40 = por %p38, %p39
    %p41 = scmp.ne.s32.totalorder %s33, %s36
    %p42 = scmp.eq.s32.totalorder %s9, 0
    %p43 = por %p41, %p42
    %p44 = scmp.ne.s32.totalorder %s33, %s36
    %p45 = scmp.eq.s32.totalorder %s14, 1
    %p46 = por %p44, %p45
    %p47 = scmp.ne.s32.totalorder %s36, %s37
    %p48 = scmp.eq.s32.totalorder %s14, 0
    %p49 = por %p47, %p48
    %p50 = scmp.ne.s32.totalorder %s36, %s37
    %p51 = scmp.eq.s32.totalorder %s15, 1
    %p52 = por %p50, %p51
    %p54 = scmp.ne.s32.totalorder %s37, %s53
    %p55 = scmp.eq.s32.totalorder %s15, 0
    %p56 = por %p54, %p55
    %s58 = sadd.s32 %s57, 1
    %p61 = scmp.eq.s32.totalorder %s9, 1
    %p62 = scmp.ne.s32.totalorder %s57, %s59
    %p63 = scmp.eq.s32.totalorder %s9, 0
    %p64 = por %p62, %p63
    %p65 = scmp.ne.s32.totalorder %s57, %s59
    %p66 = scmp.eq.s32.totalorder %s14, 1
    %p67 = por %p65, %p66
    %p68 = scmp.ne.s32.totalorder %s59, %s60
    %p69 = scmp.eq.s32.totalorder %s14, 0
    %p70 = por %p68, %p69
    %p71 = scmp.ne.s32.totalorder %s59, %s60
    %p72 = scmp.eq.s32.totalorder %s15, 1
    %p73 = por %p71, %p72
    %p75 = scmp.ne.s32.totalorder %s60, %s74
    %p76 = scmp.eq.s32.totalorder %s15, 0
    %p77 = por %p75, %p76
    %s79 = sadd.s32 %s78, 1
    %p82 = scmp.eq.s32.totalorder %s9, 1
    %p83 = scmp.ne.s32.totalorder %s78, %s80
    %p84 = scmp.eq.s32.totalorder %s9, 0
    %p85 = por %p83, %p84
    %p86 = scmp.ne.s32.totalorder %s78, %s80
    %p87 = scmp.eq.s32.totalorder %s14, 1
    %p88 = por %p86, %p87
    %p89 = scmp.ne.s32.totalorder %s80, %s81
    %p90 = scmp.eq.s32.totalorder %s14, 0
    %p91 = por %p89, %p90
    %p92 = scmp.ne.s32.totalorder %s80, %s81
    %p93 = scmp.eq.s32.totalorder %s15, 1
    %p94 = por %p92, %p93
    %p96 = scmp.ne.s32.totalorder %s81, %s95
    %p97 = scmp.eq.s32.totalorder %s15, 0
    %p98 = por %p96, %p97
    %s99 = ssub.s32 %s16, %s28
    %s100 = ssub.s32 %s17, %s24
    %s101 = sor.u32 %s99, %s100
    %p102 = scmp.eq.s32.totalorder %s101, 0
    %s104 = sadd.s32 %s103, 1
    %s105 = scalar_select %p102, %s103, %s104
    %p108 = pneg %p102
    %p109 = scmp.eq.s32.totalorder %s9, 1
    %p110 = por %p108, %p109
    %p111 = scmp.ne.s32.totalorder %s103, %s106
    %p112 = scmp.eq.s32.totalorder %s9, 0
    %p113 = por %p111, %p112
    %p114 = scmp.ne.s32.totalorder %s103, %s106
    %p115 = scmp.eq.s32.totalorder %s14, 1
    %p116 = por %p114, %p115
    %p117 = scmp.ne.s32.totalorder %s106, %s107
    %p118 = scmp.eq.s32.totalorder %s14, 0
    %p119 = por %p117, %p118
    %p120 = scmp.ne.s32.totalorder %s106, %s107
    %p121 = scmp.eq.s32.totalorder %s15, 1
    %p122 = por %p120, %p121
    %p124 = scmp.ne.s32.totalorder %s107, %s123
    %p125 = scmp.eq.s32.totalorder %s15, 0
    %p126 = por %p124, %p125
    %p127 = scmp.le.s32.totalorder 1, %s9
    %p128 = scmp.lt.s32.totalorder %s9, 3
    %p129 = pnand %p127, %p128
    %p130 = pneg %p129
    // Predicated region
    $region9: #{tpu_custom_call.1} parent=5 // pred_check
      _
    $region10: #{tpu_custom_call.1} parent=5 // pred_check_branch
      %132 = sbr.rel (%p129) target = $region12
    $region11: #{tpu_custom_call.1} parent=5 // pred_region
      %s133 = ssub.s32 %s9, 1
      // Predicated region
      $region13: #{tpu_custom_call.1} parent=11 // pred_check
        %p134 = pneg %p70
      $region14: #{tpu_custom_call.1} parent=11 // pred_check_branch
        %136 = sbr.rel (%p134) target = $region16
      $region15: #{tpu_custom_call.1} parent=11 // pred_region
        _
      $region16: #{tpu_custom_call.1} parent=11 // pred_fallthru
        _
      // Predicated region
      $region17: #{tpu_custom_call.1} parent=11 // pred_check
        %p137 = pneg %p91
      $region18: #{tpu_custom_call.1} parent=11 // pred_check_branch
        %139 = sbr.rel (%p137) target = $region20
      $region19: #{tpu_custom_call.1} parent=11 // pred_region
        _
      $region20: #{tpu_custom_call.1} parent=11 // pred_fallthru
        _
    $region12: #{tpu_custom_call.1} parent=5 // pred_fallthru
      _
    %p140 = scmp.lt.s32.totalorder %s9, 2
    // Predicated region
    $region21: #{tpu_custom_call.1} parent=5 // pred_check
      %p141 = pneg %p140
    $region22: #{tpu_custom_call.1} parent=5 // pred_check_branch
      %143 = sbr.rel (%p141) target = $region24
    $region23: #{tpu_custom_call.1} parent=5 // pred_region
      // Predicated region
      $region25: #{tpu_custom_call.1} parent=23 // pred_check
        %p144 = pneg %p43
      $region26: #{tpu_custom_call.1} parent=23 // pred_check_branch
        %146 = sbr.rel (%p144) target = $region28
      $region27: #{tpu_custom_call.1} parent=23 // pred_region
        %s147 = smul.u32 8, %s17
        %p148 = scmp.lt.s32.totalorder %s16, 1
        %s149 = scalar_select %p148, %s16, 1
        %p150 = scmp.lt.s32.totalorder %s147, 7
        %s151 = scalar_select %p150, %s147, 7
        %s152 = smul.addr %s149, 8
        %s153 = sadd.s32 %s151, %s152
        %s154 = smul.addr %s153, 8
        %s155 = scalar_lea.vmem %s0, %s154
        %s156 = smul.u32 8, %s17
      $region28: #{tpu_custom_call.1} parent=23 // pred_fallthru
        _
    $region24: #{tpu_custom_call.1} parent=5 // pred_fallthru
      _
    %p157 = scmp.le.s32.totalorder 1, %s9
    %p158 = scmp.lt.s32.totalorder %s9, 3
    %p159 = pnand %p157, %p158
    %p160 = pneg %p159
    // Predicated region
    $region29: #{tpu_custom_call.1} parent=5 // pred_check
      _
    $region30: #{tpu_custom_call.1} parent=5 // pred_check_branch
      %162 = sbr.rel (%p159) target = $region32
    $region31: #{tpu_custom_call.1} parent=5 // pred_region
      %s163 = ssub.s32 %s9, 1
      %s164 = smul.u32 8, %s19
      %p165 = scmp.lt.s32.totalorder %s18, 1
      %s166 = scalar_select %p165, %s18, 1
      %p167 = scmp.lt.s32.totalorder %s164, 7
      %s168 = scalar_select %p167, %s164, 7
      %s169 = smul.addr %s166, 8
      %s170 = sadd.s32 %s168, %s169
      %s171 = smul.addr %s170, 8
      %s172 = scalar_lea.vmem %s0, %s171
      %p173 = pneg %p49
      %p174 = pneg %p46
      %p175 = pneg %p70
      %p176 = pneg %p67
      %p177 = pneg %p91
      %p178 = pneg %p88
      %p179 = pneg %p119
      %p180 = pneg %p116
      %s181 = smul.u32 8, %s19
      %p182 = scmp.lt.s32.totalorder %s18, 1
      %s183 = scalar_select %p182, %s18, 1
      %p184 = scmp.lt.s32.totalorder %s181, 7
      %s185 = scalar_select %p184, %s181, 7
      %s186 = smul.addr %s183, 8
      %s187 = sadd.s32 %s185, %s186
      %s188 = smul.addr %s187, 8
      %s189 = scalar_lea.vmem %s3, %s188
      %s190 = smul.u32 8, %s19
      %p191 = scmp.lt.s32.totalorder %s18, 1
      %s192 = scalar_select %p191, %s18, 1
      %p193 = scmp.lt.s32.totalorder %s190, 7
      %s194 = scalar_select %p193, %s190, 7
      %s195 = smul.addr %s192, 8
      %s196 = sadd.s32 %s194, %s195
      %s197 = smul.addr %s196, 8
      %s198 = scalar_lea.vmem %s0, %s197
      %s199 = smul.u32 8, %s19
      %s200 = smul.u32 8, %s19
      %p201 = scmp.lt.s32.totalorder %s18, 1
      %s202 = scalar_select %p201, %s18, 1
      %p203 = scmp.lt.s32.totalorder %s200, 7
      %s204 = scalar_select %p203, %s200, 7
      %s205 = smul.addr %s202, 8
      %s206 = sadd.s32 %s204, %s205
      %s207 = smul.addr %s206, 8
      %s208 = scalar_lea.vmem %s3, %s207
      %s209 = smul.u32 8, %s19
      %v210 = vld [vmem:[%s1] sm:$0x3f]
      %v211 = vld [vmem:[%s198] sm:$0x3f]
      %v212 = vld [vmem:[%s198 + $0x8] sm:$0x3f]
      %v213 = vld [vmem:[%s198 + $0x10] sm:$0x3f]
      %v214 = vld [vmem:[%s198 + $0x18] sm:$0x3f]
      %v215 = vld [vmem:[%s198 + $0x20] sm:$0x3f]
      %v216 = vld [vmem:[%s198 + $0x28] sm:$0x3f]
      %v217 = vld [vmem:[%s198 + $0x30] sm:$0x3f]
      %v218 = vld [vmem:[%s198 + $0x38] sm:$0x3f]
      %v219 = vld [vmem:[%s2] sm:$0x3f]
      %221 = vset.pattern.permute.xlu0 0
      %222 = vperm.xlu0 %221, %v219
      %v223 = vpop.permute.xlu0 %222
      %vm225 = vcmask 48128
      %v227 = vsel %vm225, %v210, 0
      %vm229 = vcmask 1045504
      %v231 = vsel %vm229, %v211, 0
      %v234 = vsel %vm229, %v212, 0
      %v237 = vsel %vm229, %v213, 0
      %v240 = vsel %vm229, %v214, 0
      %v243 = vsel %vm229, %v215, 0
      %v246 = vsel %vm229, %v216, 0
      %v249 = vsel %vm229, %v217, 0
      %v252 = vsel %vm229, %v218, 0
      %254 = vmatpush.msra.mxu0 0.0
      %255 = vmatpush.msra.mxu0 0.0
      %256 = vmatpush.msra.mxu0 0.0
      %257 = vmatpush.msra.mxu0 0.0
      %258 = vmatpush.msra.mxu0 0.0
      %259 = vmatpush.msra.mxu0 0.0
      %260 = vmatpush.msra.mxu0 0.0
      %261 = vmatpush.msra.mxu0 0.0
      %262 = vmatpush.msra.mxu0 0.0
      %263 = vmatpush.msra.mxu0 0.0
      %264 = vmatpush.msra.mxu0 0.0
      %265 = vmatpush.msra.mxu0 0.0
      %266 = vmatpush.msra.mxu0 0.0
      %267 = vmatpush.msra.mxu0 0.0
      %268 = vmatpush.msra.mxu0 0.0
      %269 = vmatpush.msra.mxu0 %v231
      %270 = vmatmul.f32.gmra.mxu0 %v227
      %v271 = vpop.f32.mrf.mxu0
      %v272 = vadd.f32 %v223, %v271
      %273 = vdwg.mxu0
      %274 = vmatpush.msra.mxu0 0.0
      %275 = vmatpush.msra.mxu0 0.0
      %276 = vmatpush.msra.mxu0 0.0
      %277 = vmatpush.msra.mxu0 0.0
      %278 = vmatpush.msra.mxu0 0.0
      %279 = vmatpush.msra.mxu0 0.0
      %280 = vmatpush.msra.mxu0 0.0
      %281 = vmatpush.msra.mxu0 0.0
      %282 = vmatpush.msra.mxu0 0.0
      %283 = vmatpush.msra.mxu0 0.0
      %284 = vmatpush.msra.mxu0 0.0
      %285 = vmatpush.msra.mxu0 0.0
      %286 = vmatpush.msra.mxu0 0.0
      %287 = vmatpush.msra.mxu0 0.0
      %288 = vmatpush.msra.mxu0 0.0
      %289 = vmatpush.msra.mxu0 %v234
      %290 = vmatmul.f32.gmra.mxu0 %v227
      %v291 = vpop.f32.mrf.mxu0
      %v292 = vadd.f32 %v223, %v291
      %293 = vdwg.mxu0
      %294 = vmatpush.msra.mxu0 0.0
      %295 = vmatpush.msra.mxu0 0.0
      %296 = vmatpush.msra.mxu0 0.0
      %297 = vmatpush.msra.mxu0 0.0
      %298 = vmatpush.msra.mxu0 0.0
      %299 = vmatpush.msra.mxu0 0.0
      %300 = vmatpush.msra.mxu0 0.0
      %301 = vmatpush.msra.mxu0 0.0
      %302 = vmatpush.msra.mxu0 0.0
      %303 = vmatpush.msra.mxu0 0.0
      %304 = vmatpush.msra.mxu0 0.0
      %305 = vmatpush.msra.mxu0 0.0
      %306 = vmatpush.msra.mxu0 0.0
      %307 = vmatpush.msra.mxu0 0.0
      %308 = vmatpush.msra.mxu0 0.0
      %309 = vmatpush.msra.mxu0 %v237
      %310 = vmatmul.f32.gmra.mxu0 %v227
      %v311 = vpop.f32.mrf.mxu0
      %v312 = vadd.f32 %v223, %v311
      %313 = vdwg.mxu0
      %314 = vmatpush.msra.mxu0 0.0
      %315 = vmatpush.msra.mxu0 0.0
      %316 = vmatpush.msra.mxu0 0.0
      %317 = vmatpush.msra.mxu0 0.0
      %318 = vmatpush.msra.mxu0 0.0
      %319 = vmatpush.msra.mxu0 0.0
      %320 = vmatpush.msra.mxu0 0.0
      %321 = vmatpush.msra.mxu0 0.0
      %322 = vmatpush.msra.mxu0 0.0
      %323 = vmatpush.msra.mxu0 0.0
      %324 = vmatpush.msra.mxu0 0.0
      %325 = vmatpush.msra.mxu0 0.0
      %326 = vmatpush.msra.mxu0 0.0
      %327 = vmatpush.msra.mxu0 0.0
      %328 = vmatpush.msra.mxu0 0.0
      %329 = vmatpush.msra.mxu0 %v240
      %330 = vmatmul.f32.gmra.mxu0 %v227
      %v331 = vpop.f32.mrf.mxu0
      %v332 = vadd.f32 %v223, %v331
      %333 = vdwg.mxu0
      %334 = vmatpush.msra.mxu0 0.0
      %335 = vmatpush.msra.mxu0 0.0
      %336 = vmatpush.msra.mxu0 0.0
      %337 = vmatpush.msra.mxu0 0.0
      %338 = vmatpush.msra.mxu0 0.0
      %339 = vmatpush.msra.mxu0 0.0
      %340 = vmatpush.msra.mxu0 0.0
      %341 = vmatpush.msra.mxu0 0.0
      %342 = vmatpush.msra.mxu0 0.0
      %343 = vmatpush.msra.mxu0 0.0
      %344 = vmatpush.msra.mxu0 0.0
      %345 = vmatpush.msra.mxu0 0.0
      %346 = vmatpush.msra.mxu0 0.0
      %347 = vmatpush.msra.mxu0 0.0
      %348 = vmatpush.msra.mxu0 0.0
      %349 = vmatpush.msra.mxu0 %v243
      %350 = vmatmul.f32.gmra.mxu0 %v227
      %v351 = vpop.f32.mrf.mxu0
      %v352 = vadd.f32 %v223, %v351
      %353 = vdwg.mxu0
      %354 = vmatpush.msra.mxu0 0.0
      %355 = vmatpush.msra.mxu0 0.0
      %356 = vmatpush.msra.mxu0 0.0
      %357 = vmatpush.msra.mxu0 0.0
      %358 = vmatpush.msra.mxu0 0.0
      %359 = vmatpush.msra.mxu0 0.0
      %360 = vmatpush.msra.mxu0 0.0
      %361 = vmatpush.msra.mxu0 0.0
      %362 = vmatpush.msra.mxu0 0.0
      %363 = vmatpush.msra.mxu0 0.0
      %364 = vmatpush.msra.mxu0 0.0
      %365 = vmatpush.msra.mxu0 0.0
      %366 = vmatpush.msra.mxu0 0.0
      %367 = vmatpush.msra.mxu0 0.0
      %368 = vmatpush.msra.mxu0 0.0
      %369 = vmatpush.msra.mxu0 %v246
      %370 = vmatmul.f32.gmra.mxu0 %v227
      %v371 = vpop.f32.mrf.mxu0
      %v372 = vadd.f32 %v223, %v371
      %373 = vdwg.mxu0
      %374 = vmatpush.msra.mxu0 0.0
      %375 = vmatpush.msra.mxu0 0.0
      %376 = vmatpush.msra.mxu0 0.0
      %377 = vmatpush.msra.mxu0 0.0
      %378 = vmatpush.msra.mxu0 0.0
      %379 = vmatpush.msra.mxu0 0.0
      %380 = vmatpush.msra.mxu0 0.0
      %381 = vmatpush.msra.mxu0 0.0
      %382 = vmatpush.msra.mxu0 0.0
      %383 = vmatpush.msra.mxu0 0.0
      %384 = vmatpush.msra.mxu0 0.0
      %385 = vmatpush.msra.mxu0 0.0
      %386 = vmatpush.msra.mxu0 0.0
      %387 = vmatpush.msra.mxu0 0.0
      %388 = vmatpush.msra.mxu0 0.0
      %389 = vmatpush.msra.mxu0 %v249
      %390 = vmatmul.f32.gmra.mxu0 %v227
      %v391 = vpop.f32.mrf.mxu0
      %v392 = vadd.f32 %v223, %v391
      %393 = vdwg.mxu0
      %394 = vmatpush.msra.mxu0 0.0
      %395 = vmatpush.msra.mxu0 0.0
      %396 = vmatpush.msra.mxu0 0.0
      %397 = vmatpush.msra.mxu0 0.0
      %398 = vmatpush.msra.mxu0 0.0
      %399 = vmatpush.msra.mxu0 0.0
      %400 = vmatpush.msra.mxu0 0.0
      %401 = vmatpush.msra.mxu0 0.0
      %402 = vmatpush.msra.mxu0 0.0
      %403 = vmatpush.msra.mxu0 0.0
      %404 = vmatpush.msra.mxu0 0.0
      %405 = vmatpush.msra.mxu0 0.0
      %406 = vmatpush.msra.mxu0 0.0
      %407 = vmatpush.msra.mxu0 0.0
      %408 = vmatpush.msra.mxu0 0.0
      %409 = vmatpush.msra.mxu0 %v252
      %410 = vmatmul.f32.gmra.mxu0 %v227
      %v411 = vpop.f32.mrf.mxu0
      %v412 = vadd.f32 %v223, %v411
      %413 = vdwg.mxu0
      %v414 = vtanh.pop %v272
      %v415 = vtanh.pop %v292
      %v416 = vtanh.pop %v312
      %v417 = vtanh.pop %v332
      %v418 = vtanh.pop %v352
      %v419 = vtanh.pop %v372
      %v420 = vtanh.pop %v392
      %v421 = vtanh.pop %v412
      %422 = vst [vmem:[%s208] sm:$0x3f] %v414
      %423 = vst [vmem:[%s208 + $0x8] sm:$0x3f] %v415
      %424 = vst [vmem:[%s208 + $0x10] sm:$0x3f] %v416
      %425 = vst [vmem:[%s208 + $0x18] sm:$0x3f] %v417
      %426 = vst [vmem:[%s208 + $0x20] sm:$0x3f] %v418
      %427 = vst [vmem:[%s208 + $0x28] sm:$0x3f] %v419
      %428 = vst [vmem:[%s208 + $0x30] sm:$0x3f] %v420
      %429 = vst [vmem:[%s208 + $0x38] sm:$0x3f] %v421
      %s430 = smul.u32 8, %s19
      %p431 = scmp.lt.s32.totalorder %s18, 1
      %s432 = scalar_select %p431, %s18, 1
      %p433 = scmp.lt.s32.totalorder %s430, 7
      %s434 = scalar_select %p433, %s430, 7
      %s435 = smul.addr %s432, 8
      %s436 = sadd.s32 %s434, %s435
      %s437 = smul.addr %s436, 8
      %s438 = scalar_lea.vmem %s3, %s437
      // Predicated region
      $region33: #{tpu_custom_call.1} parent=31 // pred_check
        %p439 = pneg %p116
      $region34: #{tpu_custom_call.1} parent=31 // pred_check_branch
        %441 = sbr.rel (%p439) target = $region36
      $region35: #{tpu_custom_call.1} parent=31 // pred_region
        %s442 = smul.u32 8, %s19
      $region36: #{tpu_custom_call.1} parent=31 // pred_fallthru
        _
    $region32: #{tpu_custom_call.1} parent=5 // pred_fallthru
      _
    %p443 = scmp.le.s32.totalorder 2, %s9
    // Predicated region
    $region37: #{tpu_custom_call.1} parent=5 // pred_check
      %p444 = pneg %p443
    $region38: #{tpu_custom_call.1} parent=5 // pred_check_branch
      %446 = sbr.rel (%p444) target = $region40
    $region39: #{tpu_custom_call.1} parent=5 // pred_region
      %s447 = ssub.s32 %s9, 2
      // Predicated region
      $region41: #{tpu_custom_call.1} parent=39 // pred_check
        %p448 = pneg %p122
      $region42: #{tpu_custom_call.1} parent=39 // pred_check_branch
        %450 = sbr.rel (%p448) target = $region44
      $region43: #{tpu_custom_call.1} parent=39 // pred_region
        %s451 = smul.u32 8, %s21
        %p452 = scmp.lt.s32.totalorder %s20, 1
        %s453 = scalar_select %p452, %s20, 1
        %p454 = scmp.lt.s32.totalorder %s451, 7
        %s455 = scalar_select %p454, %s451, 7
        %s456 = smul.addr %s453, 8
        %s457 = sadd.s32 %s455, %s456
        %s458 = smul.addr %s457, 8
        %s459 = scalar_lea.vmem %s3, %s458
      $region44: #{tpu_custom_call.1} parent=39 // pred_fallthru
        _
    $region40: #{tpu_custom_call.1} parent=5 // pred_fallthru
      _
  $region6: #{tpu_custom_call.1} parent=0 // loop_footer
    %s13 = sadd.s32 1, %s9
  $region7: #{tpu_custom_call.1} parent=0 // loop_footer_branch
    %8 = sbr.rel target = $region3
  $region8: #{tpu_custom_call.1} parent=0 // loop_exit
    _

</llo_original>
